<compile_context>
chip_gen: v7x
topology: tpu7x:2x2x1
jax: 0.10.0
libtpu: 0.0.40
codegen_flags: <defaults>
</compile_context>

<pallas_src>
import functools

import numpy as np
import jax
import jax.numpy as jnp
from jax.experimental import pallas as pl
from jax.experimental.pallas import tpu as pltpu

WIN_SIZE = 11
WIN_SIGMA = 1.5
K1 = 0.01
K2 = 0.03


def _fspecial_gauss_1d(size, sigma):
    # Matches pytorch_msssim._fspecial_gauss_1d
    coords = np.arange(size, dtype=np.float64) - size // 2
    g = np.exp(-(coords ** 2) / (2.0 * sigma ** 2))
    g = g / g.sum()
    return g.astype(np.float32)


def _banded_filter_matrices(h, w, win):
    """Constant banded matrices implementing the 'valid' separable Gaussian conv.

    gh: (H_out, H)  so that  gh @ X  filters along H.
    gw: (W, W_out)  so that  X @ gw  filters along W.
    """
    h_out = h - WIN_SIZE + 1
    w_out = w - WIN_SIZE + 1
    gh = np.zeros((h_out, h), dtype=np.float32)
    gw = np.zeros((w, w_out), dtype=np.float32)
    for k in range(WIN_SIZE):
        gh[np.arange(h_out), np.arange(h_out) + k] = win[k]
        gw[np.arange(w_out) + k, np.arange(w_out)] = win[k]
    return gh, gw


def _ssim_kernel(x_ref, y_ref, gh_ref, gw_ref, out_ref, *, h, c1, c2):
    # x_ref, y_ref : (H, W) image pair for one (n, c).
    # gh_ref       : (H_out, H) banded Gaussian (H pass).
    # gw_ref       : (W, W_out) banded Gaussian (W pass).
    # out_ref      : (1, 1) per-image SSIM-map sum.
    x = x_ref[...].astype(jnp.float32)
    y = y_ref[...].astype(jnp.float32)
    gh = gh_ref[...]
    gw = gw_ref[...]

    # Stack the five quantities along the non-contracted (sublane) axis so the
    # W-pass is one MXU matmul for all of them.
    stacked = jnp.concatenate([x, y, x * x, y * y, x * y], axis=0)   # (5H, W)
    tw = jnp.dot(stacked, gw, preferred_element_type=jnp.float32)    # (5H, Wo)

    # H-pass: one small MXU matmul per quantity (sublane-aligned static slices).
    def hpass(q):
        return jnp.dot(gh, tw[q * h:(q + 1) * h, :],
                       preferred_element_type=jnp.float32)           # (Ho, Wo)

    mu1, mu2, gxx, gyy, gxy = (hpass(q) for q in range(5))

    mu1_sq = mu1 * mu1
    mu2_sq = mu2 * mu2
    mu1_mu2 = mu1 * mu2
    sigma1_sq = gxx - mu1_sq
    sigma2_sq = gyy - mu2_sq
    sigma12 = gxy - mu1_mu2

    # Fuse the two SSIM divides into a single (exact) reciprocal.
    num = (2.0 * mu1_mu2 + c1) * (2.0 * sigma12 + c2)
    den = (mu1_sq + mu2_sq + c1) * (sigma1_sq + sigma2_sq + c2)
    ssim_map = num * pl.reciprocal(den, approx=False)

    out_ref[...] = jnp.sum(ssim_map, keepdims=True)


def ssim_loss(img1, img2, data_range=1.0):
    """1 - SSIM(img1, img2), matching SSIMLoss.forward (size_average=True)."""
    assert img1.shape == img2.shape and img1.ndim == 4
    n, c, h, w = img1.shape
    assert h >= WIN_SIZE and w >= WIN_SIZE, "spatial dims must be >= win_size"
    nc = n * c
    h_out = h - WIN_SIZE + 1
    w_out = w - WIN_SIZE + 1

    win = _fspecial_gauss_1d(WIN_SIZE, WIN_SIGMA)
    gh_np, gw_np = _banded_filter_matrices(h, w, win)
    gh = jnp.asarray(gh_np)
    gw = jnp.asarray(gw_np)

    c1 = float((K1 * data_range) ** 2)
    c2 = float((K2 * data_range) ** 2)

    x = img1.reshape(nc, h, w).astype(jnp.float32)
    y = img2.reshape(nc, h, w).astype(jnp.float32)

    kernel = functools.partial(_ssim_kernel, h=h, c1=c1, c2=c2)

    # Per-step VMEM estimate (double-buffered inputs + filter constants +
    # in-kernel intermediates), with 2x headroom, clamped to [16, 64] MiB so it
    # is valid on every generation (v7x has 64 MiB physical per TC).
    est_vmem = 4 * (2 * 2 * h * w              # double-buffered x, y blocks
                    + h_out * h + w * w_out    # gh, gw
                    + 5 * h * w                # stacked quantities
                    + 5 * h * w_out            # W-pass result
                    + 16 * h_out * w_out)      # filtered maps / SSIM temporaries
    vmem_limit = int(min(max(2 * est_vmem, 16 * 1024 * 1024), 64 * 1024 * 1024))

    flops_per_img = (2 * 5 * h * w_out * w         # W-pass matmul
                     + 2 * 5 * h_out * w_out * h   # H-pass matmuls
                     + 25 * h_out * w_out          # SSIM elementwise math
                     + 5 * h * w)                  # squares / products
    cost = pl.CostEstimate(flops=nc * flops_per_img,
                           transcendentals=0,
                           bytes_accessed=2 * nc * h * w * 4 + nc * 4)

    sums = pl.pallas_call(
        kernel,
        out_shape=jax.ShapeDtypeStruct((nc, 1, 1), jnp.float32),
        grid=(nc,),
        in_specs=[
            pl.BlockSpec((None, h, w), lambda i: (i, 0, 0)),
            pl.BlockSpec((None, h, w), lambda i: (i, 0, 0)),
            pl.BlockSpec((h_out, h), lambda i: (0, 0)),
            pl.BlockSpec((w, w_out), lambda i: (0, 0)),
        ],
        out_specs=pl.BlockSpec((None, 1, 1), lambda i: (i, 0, 0)),
        compiler_params=pltpu.CompilerParams(
            dimension_semantics=("parallel",),
            vmem_limit_bytes=vmem_limit,
        ),
        cost_estimate=cost,
    )(x, y, gh, gw)

    # Matches pytorch_msssim: per-channel spatial mean, then mean over (N, C).
    ssim_per_channel = sums[:, 0, 0] / float(h_out * w_out)
    return 1.0 - jnp.mean(ssim_per_channel)


if __name__ == "__main__":
    key = jax.random.PRNGKey(0)
    k1, k2 = jax.random.split(key)
    # channel=3 matches the module default; data_range=1.0 -> inputs in [0, 1].
    img1 = jax.random.uniform(k1, (2, 3, 16, 16), dtype=jnp.float32)
    img2 = jax.random.uniform(k2, (2, 3, 16, 16), dtype=jnp.float32)

    loss = ssim_loss(img1, img2, data_range=1.0)
    jax.block_until_ready(loss)
    print("KERNEL_OK")
</pallas_src>

<mosaic_0001>
module attributes {stable_mosaic.version = 11 : i64} {
  func.func @_ssim_kernel(%arg0: i32, %arg1: memref<1x16x16xf32, #tpu.memory_space<vmem>>, %arg2: memref<1x16x16xf32, #tpu.memory_space<vmem>>, %arg3: memref<6x16xf32, #tpu.memory_space<vmem>>, %arg4: memref<16x6xf32, #tpu.memory_space<vmem>>, %arg5: memref<1x1x1xf32, #tpu.memory_space<vmem>>) attributes {dimension_semantics = [#tpu.dimension_semantics<parallel>], iteration_bounds = array<i64: 6>, scalar_prefetch = 0 : i64, scratch_operands = 0 : i64, tpu.core_type = #tpu.core_type<tc>, window_params = [{transform_indices = @transform_0, window_bounds = array<i64: 1, 16, 16>}, {transform_indices = @transform_1, window_bounds = array<i64: 1, 16, 16>}, {pipeline_mode = #tpu.pipeline_mode<synchronous>, transform_indices = @transform_2, window_bounds = array<i64: 6, 16>}, {pipeline_mode = #tpu.pipeline_mode<synchronous>, transform_indices = @transform_3, window_bounds = array<i64: 16, 6>}, {transform_indices = @transform_4, window_bounds = array<i64: 1, 1, 1>}]} {
    %c0 = arith.constant 0 : index
    %c0_0 = arith.constant 0 : index
    %c0_1 = arith.constant 0 : index
    %0 = vector.load %arg1[%c0, %c0_0, %c0_1] : memref<1x16x16xf32, #tpu.memory_space<vmem>>, vector<1x16x16xf32>
    %1 = vector.shape_cast %0 : vector<1x16x16xf32> to vector<16x16xf32>
    %c0_2 = arith.constant 0 : index
    %c0_3 = arith.constant 0 : index
    %c0_4 = arith.constant 0 : index
    %2 = vector.load %arg2[%c0_2, %c0_3, %c0_4] : memref<1x16x16xf32, #tpu.memory_space<vmem>>, vector<1x16x16xf32>
    %3 = vector.shape_cast %2 : vector<1x16x16xf32> to vector<16x16xf32>
    %c0_5 = arith.constant 0 : index
    %c0_6 = arith.constant 0 : index
    %4 = vector.load %arg3[%c0_5, %c0_6] : memref<6x16xf32, #tpu.memory_space<vmem>>, vector<6x16xf32>
    %c0_7 = arith.constant 0 : index
    %c0_8 = arith.constant 0 : index
    %5 = vector.load %arg4[%c0_7, %c0_8] : memref<16x6xf32, #tpu.memory_space<vmem>>, vector<16x6xf32>
    %6 = arith.mulf %1, %1 : vector<16x16xf32>
    %7 = arith.mulf %3, %3 : vector<16x16xf32>
    %8 = arith.mulf %1, %3 : vector<16x16xf32>
    %9 = tpu.concatenate %1, %3, %6, %7, %8 in 0 : vector<16x16xf32>, vector<16x16xf32>, vector<16x16xf32>, vector<16x16xf32>, vector<16x16xf32> -> vector<80x16xf32>
    %cst = arith.constant dense<0.000000e+00> : vector<80x6xf32>
    %10 = tpu.matmul %9, %5, %cst {dimension_numbers = #tpu.dot_dimension_numbers<[1], [0], [0], [1], [0, 0, 1, 1], [], []>} : vector<80x16xf32>, vector<16x6xf32>, vector<80x6xf32> -> vector<80x6xf32>
    %11 = vector.extract_strided_slice %10 {offsets = [0, 0], sizes = [16, 6], strides = [1, 1]} : vector<80x6xf32> to vector<16x6xf32>
    %cst_9 = arith.constant dense<0.000000e+00> : vector<6x6xf32>
    %12 = tpu.matmul %4, %11, %cst_9 {dimension_numbers = #tpu.dot_dimension_numbers<[1], [0], [0], [1], [0, 0, 1, 1], [], []>} : vector<6x16xf32>, vector<16x6xf32>, vector<6x6xf32> -> vector<6x6xf32>
    %13 = vector.extract_strided_slice %10 {offsets = [16, 0], sizes = [16, 6], strides = [1, 1]} : vector<80x6xf32> to vector<16x6xf32>
    %cst_10 = arith.constant dense<0.000000e+00> : vector<6x6xf32>
    %14 = tpu.matmul %4, %13, %cst_10 {dimension_numbers = #tpu.dot_dimension_numbers<[1], [0], [0], [1], [0, 0, 1, 1], [], []>} : vector<6x16xf32>, vector<16x6xf32>, vector<6x6xf32> -> vector<6x6xf32>
    %15 = vector.extract_strided_slice %10 {offsets = [32, 0], sizes = [16, 6], strides = [1, 1]} : vector<80x6xf32> to vector<16x6xf32>
    %cst_11 = arith.constant dense<0.000000e+00> : vector<6x6xf32>
    %16 = tpu.matmul %4, %15, %cst_11 {dimension_numbers = #tpu.dot_dimension_numbers<[1], [0], [0], [1], [0, 0, 1, 1], [], []>} : vector<6x16xf32>, vector<16x6xf32>, vector<6x6xf32> -> vector<6x6xf32>
    %17 = vector.extract_strided_slice %10 {offsets = [48, 0], sizes = [16, 6], strides = [1, 1]} : vector<80x6xf32> to vector<16x6xf32>
    %cst_12 = arith.constant dense<0.000000e+00> : vector<6x6xf32>
    %18 = tpu.matmul %4, %17, %cst_12 {dimension_numbers = #tpu.dot_dimension_numbers<[1], [0], [0], [1], [0, 0, 1, 1], [], []>} : vector<6x16xf32>, vector<16x6xf32>, vector<6x6xf32> -> vector<6x6xf32>
    %19 = vector.extract_strided_slice %10 {offsets = [64, 0], sizes = [16, 6], strides = [1, 1]} : vector<80x6xf32> to vector<16x6xf32>
    %cst_13 = arith.constant dense<0.000000e+00> : vector<6x6xf32>
    %20 = tpu.matmul %4, %19, %cst_13 {dimension_numbers = #tpu.dot_dimension_numbers<[1], [0], [0], [1], [0, 0, 1, 1], [], []>} : vector<6x16xf32>, vector<16x6xf32>, vector<6x6xf32> -> vector<6x6xf32>
    %21 = arith.mulf %12, %12 : vector<6x6xf32>
    %22 = arith.mulf %14, %14 : vector<6x6xf32>
    %23 = arith.mulf %12, %14 : vector<6x6xf32>
    %24 = arith.subf %16, %21 : vector<6x6xf32>
    %25 = arith.subf %18, %22 : vector<6x6xf32>
    %26 = arith.subf %20, %23 : vector<6x6xf32>
    %cst_14 = arith.constant 2.000000e+00 : f32
    %27 = vector.broadcast %cst_14 : f32 to vector<6x6xf32>
    %28 = arith.mulf %27, %23 : vector<6x6xf32>
    %cst_15 = arith.constant 9.99999974E-5 : f32
    %29 = vector.broadcast %cst_15 : f32 to vector<6x6xf32>
    %30 = arith.addf %28, %29 : vector<6x6xf32>
    %cst_16 = arith.constant 2.000000e+00 : f32
    %31 = vector.broadcast %cst_16 : f32 to vector<6x6xf32>
    %32 = arith.mulf %31, %26 : vector<6x6xf32>
    %cst_17 = arith.constant 8.99999984E-4 : f32
    %33 = vector.broadcast %cst_17 : f32 to vector<6x6xf32>
    %34 = arith.addf %32, %33 : vector<6x6xf32>
    %35 = arith.mulf %30, %34 : vector<6x6xf32>
    %36 = arith.addf %21, %22 : vector<6x6xf32>
    %cst_18 = arith.constant 9.99999974E-5 : f32
    %37 = vector.broadcast %cst_18 : f32 to vector<6x6xf32>
    %38 = arith.addf %36, %37 : vector<6x6xf32>
    %39 = arith.addf %24, %25 : vector<6x6xf32>
    %cst_19 = arith.constant 8.99999984E-4 : f32
    %40 = vector.broadcast %cst_19 : f32 to vector<6x6xf32>
    %41 = arith.addf %39, %40 : vector<6x6xf32>
    %42 = arith.mulf %38, %41 : vector<6x6xf32>
    %43 = tpu.reciprocal %42 : vector<6x6xf32> -> vector<6x6xf32>
    %44 = arith.mulf %35, %43 : vector<6x6xf32>
    %45 = vector.shape_cast %44 : vector<6x6xf32> to vector<1x6x6xf32>
    %cst_20 = arith.constant dense<0.000000e+00> : vector<1xf32>
    %46 = vector.multi_reduction <add>, %45, %cst_20 [1, 2] : vector<1x6x6xf32> to vector<1xf32>
    %47 = vector.shape_cast %46 : vector<1xf32> to vector<1x1x1xf32>
    %48 = vector.extract %47[0, 0, 0] : f32 from vector<1x1x1xf32>
    %49 = vector.broadcast %48 : f32 to vector<1x1xf32>
    %c0_21 = arith.constant 0 : index
    %c0_22 = arith.constant 0 : index
    %c0_23 = arith.constant 0 : index
    %50 = vector.load %arg5[%c0_21, %c0_22, %c0_23] : memref<1x1x1xf32, #tpu.memory_space<vmem>>, vector<1x1x1xf32>
    %51 = vector.shape_cast %50 : vector<1x1x1xf32> to vector<1x1xf32>
    %52 = vector.shape_cast %49 : vector<1x1xf32> to vector<1x1x1xf32>
    tpu.vector_store %arg5[%c0_21, %c0_22, %c0_23], %52 {strides = array<i32>} : memref<1x1x1xf32, #tpu.memory_space<vmem>>, vector<1x1x1xf32>,
    return
  }
  func.func @transform_0(%arg0: i32) -> (i32, i32, i32) {
    %c0_i32 = arith.constant 0 : i32
    %c0_i32_0 = arith.constant 0 : i32
    %c0_i32_1 = arith.constant 0 : i32
    return %arg0, %c0_i32, %c0_i32_0 : i32, i32, i32
  }
  func.func @transform_1(%arg0: i32) -> (i32, i32, i32) {
    %c0_i32 = arith.constant 0 : i32
    %c0_i32_0 = arith.constant 0 : i32
    %c0_i32_1 = arith.constant 0 : i32
    return %arg0, %c0_i32, %c0_i32_0 : i32, i32, i32
  }
  func.func @transform_2(%arg0: i32) -> (i32, i32) {
    %c0_i32 = arith.constant 0 : i32
    %c0_i32_0 = arith.constant 0 : i32
    %c0_i32_1 = arith.constant 0 : i32
    return %c0_i32, %c0_i32_0 : i32, i32
  }
  func.func @transform_3(%arg0: i32) -> (i32, i32) {
    %c0_i32 = arith.constant 0 : i32
    %c0_i32_0 = arith.constant 0 : i32
    %c0_i32_1 = arith.constant 0 : i32
    return %c0_i32, %c0_i32_0 : i32, i32
  }
  func.func @transform_4(%arg0: i32) -> (i32, i32, i32) {
    %c0_i32 = arith.constant 0 : i32
    %c0_i32_0 = arith.constant 0 : i32
    %c0_i32_1 = arith.constant 0 : i32
    return %arg0, %c0_i32, %c0_i32_0 : i32, i32, i32
  }
}

</mosaic_0001>

<llo_original>
// kernel: tpu_custom_call.1
$region0: #{tpu_custom_call.1}
  #allocation0 [shape = 'u32[]', space=smem, size = 0x4, offset = 0x4, fixed_abs, tag = 'smem constant byte address 0x4 - core index']
  #allocation1 [shape = 'u32[144,128]{1,0:T(1,128)}', space=vmem, size = 0x12000, scoped, tag = 'internal scratch']
  %s0 = inlined_call_operand.hbm [shape: f32[6,16,16], index: 0, kind: input, shape index: {}]
  %s1 = inlined_call_operand.hbm [shape: f32[6,16,16], index: 1, kind: input, shape index: {}]
  %s2 = inlined_call_operand.vmem [shape: f32[6,16], index: 2, kind: input, shape index: {}]
  %s3 = inlined_call_operand.vmem [shape: f32[16,6], index: 3, kind: input, shape index: {}]
  %s4 = inlined_call_operand.vmem [shape: f32[6,1,1], index: 4, kind: output, shape index: {}]
  %s5 = sld [smem:[#allocation0]]
  $region57: #{tpu_custom_call.1} parent=0
    _
  %s7 = ssub.s32 1, %s5
  %s8 = scalar_select 0, %s7, %s5
  $region1: #{tpu_custom_call.1} parent=0
    #allocation2 [shape = 'u8[16384]{0}', space=vmem, size = 0x4000, scoped, tag = 'input window, operand 0']
    #allocation3 [shape = 's32[2]{0}', space=sflag, size = 0x8, scoped, tag = 'scoped memory for tpu_custom_call.1']
    #allocation4 [shape = 'u8[16384]{0}', space=vmem, size = 0x4000, scoped, tag = 'input window, operand 1']
    #allocation5 [shape = 's32[2]{0}', space=sflag, size = 0x8, scoped, tag = 'scoped memory for tpu_custom_call.1']
    %9 = vsyncpa [#allocation3], 0
    %s10 = scalar_lea.sflag [#allocation3], 1
    %11 = vsyncpa %s10, 0
    %12 = vsyncpa [#allocation5], 0
    %s13 = scalar_lea.sflag [#allocation5], 1
    %14 = vsyncpa %s13, 0
    loop: start=0, step=1, limit=8
    $region2: #{tpu_custom_call.1} parent=1 // loop_pre_header
      _
    $region3: #{tpu_custom_call.1} parent=1 // loop_header
      %s16 = sphi 0, %s20
      %p17 = scmp.ge.s32.totalorder %s16, 8
      %s26 = sphi 0, %s28
      %s29 = sphi 0, %s26
      %s30 = sphi 0, %s29
      %s46 = sphi 0, %s30
      %s52 = sphi 0, %s54
      %s55 = sphi 0, %s52
      %s56 = sphi 0, %s55
      %s72 = sphi 0, %s56
      %s76 = sphi 0, %s76
      %s78 = sphi 0, %s76
      %s79 = sphi 0, %s78
      %s93 = sphi 0, %s79
      %s97 = sphi 0, %s97
      %s99 = sphi 0, %s97
      %s100 = sphi 0, %s99
      %s114 = sphi 0, %s100
      %s120 = sphi 0, %s122
      %s123 = sphi 0, %s120
      %s124 = sphi 0, %s123
      %s140 = sphi 0, %s124
    $region4: #{tpu_custom_call.1} parent=1 // loop_header_branch
      %19 = sbr.rel (%p17) target = $region8
    $region5: #{tpu_custom_call.1} parent=1 // loop_body
      %s21 = ssub.s32 %s16, 1
      %s22 = ssub.s32 %s16, 2
      %s23 = sadd.s32 %s16, 1
      %s24 = ssub.s32 %s16, %s23
      %p25 = scmp.eq.s32.totalorder %s24, 0
      %s27 = sadd.s32 %s26, 1
      %s28 = scalar_select %p25, %s26, %s27
      %p31 = pneg %p25
      %p32 = scmp.eq.s32.totalorder %s16, 5
      %p33 = por %p31, %p32
      %p34 = scmp.ne.s32.totalorder %s26, %s29
      %p35 = scmp.eq.s32.totalorder %s16, 0
      %p36 = por %p34, %p35
      %p37 = scmp.ne.s32.totalorder %s26, %s29
      %p38 = scmp.eq.s32.totalorder %s21, 5
      %p39 = por %p37, %p38
      %p40 = scmp.ne.s32.totalorder %s29, %s30
      %p41 = scmp.eq.s32.totalorder %s21, 0
      %p42 = por %p40, %p41
      %p43 = scmp.ne.s32.totalorder %s29, %s30
      %p44 = scmp.eq.s32.totalorder %s22, 5
      %p45 = por %p43, %p44
      %p47 = scmp.ne.s32.totalorder %s30, %s46
      %p48 = scmp.eq.s32.totalorder %s22, 0
      %p49 = por %p47, %p48
      %s50 = ssub.s32 %s16, %s23
      %p51 = scmp.eq.s32.totalorder %s50, 0
      %s53 = sadd.s32 %s52, 1
      %s54 = scalar_select %p51, %s52, %s53
      %p57 = pneg %p51
      %p58 = scmp.eq.s32.totalorder %s16, 5
      %p59 = por %p57, %p58
      %p60 = scmp.ne.s32.totalorder %s52, %s55
      %p61 = scmp.eq.s32.totalorder %s16, 0
      %p62 = por %p60, %p61
      %p63 = scmp.ne.s32.totalorder %s52, %s55
      %p64 = scmp.eq.s32.totalorder %s21, 5
      %p65 = por %p63, %p64
      %p66 = scmp.ne.s32.totalorder %s55, %s56
      %p67 = scmp.eq.s32.totalorder %s21, 0
      %p68 = por %p66, %p67
      %p69 = scmp.ne.s32.totalorder %s55, %s56
      %p70 = scmp.eq.s32.totalorder %s22, 5
      %p71 = por %p69, %p70
      %p73 = scmp.ne.s32.totalorder %s56, %s72
      %p74 = scmp.eq.s32.totalorder %s22, 0
      %p75 = por %p73, %p74
      %s77 = sadd.s32 %s76, 1
      %p80 = scmp.eq.s32.totalorder %s16, 5
      %p81 = scmp.ne.s32.totalorder %s76, %s78
      %p82 = scmp.eq.s32.totalorder %s16, 0
      %p83 = por %p81, %p82
      %p84 = scmp.ne.s32.totalorder %s76, %s78
      %p85 = scmp.eq.s32.totalorder %s21, 5
      %p86 = por %p84, %p85
      %p87 = scmp.ne.s32.totalorder %s78, %s79
      %p88 = scmp.eq.s32.totalorder %s21, 0
      %p89 = por %p87, %p88
      %p90 = scmp.ne.s32.totalorder %s78, %s79
      %p91 = scmp.eq.s32.totalorder %s22, 5
      %p92 = por %p90, %p91
      %p94 = scmp.ne.s32.totalorder %s79, %s93
      %p95 = scmp.eq.s32.totalorder %s22, 0
      %p96 = por %p94, %p95
      %s98 = sadd.s32 %s97, 1
      %p101 = scmp.eq.s32.totalorder %s16, 5
      %p102 = scmp.ne.s32.totalorder %s97, %s99
      %p103 = scmp.eq.s32.totalorder %s16, 0
      %p104 = por %p102, %p103
      %p105 = scmp.ne.s32.totalorder %s97, %s99
      %p106 = scmp.eq.s32.totalorder %s21, 5
      %p107 = por %p105, %p106
      %p108 = scmp.ne.s32.totalorder %s99, %s100
      %p109 = scmp.eq.s32.totalorder %s21, 0
      %p110 = por %p108, %p109
      %p111 = scmp.ne.s32.totalorder %s99, %s100
      %p112 = scmp.eq.s32.totalorder %s22, 5
      %p113 = por %p111, %p112
      %p115 = scmp.ne.s32.totalorder %s100, %s114
      %p116 = scmp.eq.s32.totalorder %s22, 0
      %p117 = por %p115, %p116
      %s118 = ssub.s32 %s16, %s23
      %p119 = scmp.eq.s32.totalorder %s118, 0
      %s121 = sadd.s32 %s120, 1
      %s122 = scalar_select %p119, %s120, %s121
      %p125 = pneg %p119
      %p126 = scmp.eq.s32.totalorder %s16, 5
      %p127 = por %p125, %p126
      %p128 = scmp.ne.s32.totalorder %s120, %s123
      %p129 = scmp.eq.s32.totalorder %s16, 0
      %p130 = por %p128, %p129
      %p131 = scmp.ne.s32.totalorder %s120, %s123
      %p132 = scmp.eq.s32.totalorder %s21, 5
      %p133 = por %p131, %p132
      %p134 = scmp.ne.s32.totalorder %s123, %s124
      %p135 = scmp.eq.s32.totalorder %s21, 0
      %p136 = por %p134, %p135
      %p137 = scmp.ne.s32.totalorder %s123, %s124
      %p138 = scmp.eq.s32.totalorder %s22, 5
      %p139 = por %p137, %p138
      %p141 = scmp.ne.s32.totalorder %s124, %s140
      %p142 = scmp.eq.s32.totalorder %s22, 0
      %p143 = por %p141, %p142
      %p144 = scmp.le.s32.totalorder 1, %s16
      %p145 = scmp.lt.s32.totalorder %s16, 7
      %p146 = pnand %p144, %p145
      %p147 = pneg %p146
      // Predicated region
      $region9: #{tpu_custom_call.1} parent=5 // pred_check
        _
      $region10: #{tpu_custom_call.1} parent=5 // pred_check_branch
        %149 = sbr.rel (%p146) target = $region12
      $region11: #{tpu_custom_call.1} parent=5 // pred_region
        %s150 = ssub.s32 %s16, 1
        // Predicated region
        $region13: #{tpu_custom_call.1} parent=11 // pred_check
          %p151 = pneg %p89
        $region14: #{tpu_custom_call.1} parent=11 // pred_check_branch
          %153 = sbr.rel (%p151) target = $region16
        $region15: #{tpu_custom_call.1} parent=11 // pred_region
          _
        $region16: #{tpu_custom_call.1} parent=11 // pred_fallthru
          _
        // Predicated region
        $region17: #{tpu_custom_call.1} parent=11 // pred_check
          %p154 = pneg %p110
        $region18: #{tpu_custom_call.1} parent=11 // pred_check_branch
          %156 = sbr.rel (%p154) target = $region20
        $region19: #{tpu_custom_call.1} parent=11 // pred_region
          _
        $region20: #{tpu_custom_call.1} parent=11 // pred_fallthru
          _
      $region12: #{tpu_custom_call.1} parent=5 // pred_fallthru
        _
      %p157 = scmp.lt.s32.totalorder %s16, 6
      // Predicated region
      $region21: #{tpu_custom_call.1} parent=5 // pred_check
        %p158 = pneg %p157
      $region22: #{tpu_custom_call.1} parent=5 // pred_check_branch
        %160 = sbr.rel (%p158) target = $region24
      $region23: #{tpu_custom_call.1} parent=5 // pred_region
        // Predicated region
        $region25: #{tpu_custom_call.1} parent=23 // pred_check
          %p161 = pneg %p36
        $region26: #{tpu_custom_call.1} parent=23 // pred_check_branch
          %163 = sbr.rel (%p161) target = $region28
        $region27: #{tpu_custom_call.1} parent=23 // pred_region
          %s164 = sand.u32 %s26, 1
          %s165 = scalar_lea.sflag [#allocation3], %s164
          %s166 = sand.u32 %s26, 1
          %s167 = smul.addr %s166, 16
          %s168 = scalar_lea.vmem [#allocation2], %s167
          %s170 = ssub.s32 256, 256
          %171 = vsyncadd %s165, %s170
          %s172 = smul.addr %s16, 2
          %s173 = smul.addr %s172, 128
          %s174 = scalar_lea.hbm %s0, %s173
          %s175 = sshll.u32 %s168, 4
          %s176 = int_to_ptr.vmem [resolvable:$true] %s175
          %181 = dma.hbm_to_vmem [thread:$0]  %s174, 256, %s176, %s165, 128, 128, 8
        $region28: #{tpu_custom_call.1} parent=23 // pred_fallthru
          _
        // Predicated region
        $region29: #{tpu_custom_call.1} parent=23 // pred_check
          %p182 = pneg %p62
        $region30: #{tpu_custom_call.1} parent=23 // pred_check_branch
          %184 = sbr.rel (%p182) target = $region32
        $region31: #{tpu_custom_call.1} parent=23 // pred_region
          %s185 = sand.u32 %s52, 1
          %s186 = scalar_lea.sflag [#allocation5], %s185
          %s187 = sand.u32 %s52, 1
          %s188 = smul.addr %s187, 16
          %s189 = scalar_lea.vmem [#allocation4], %s188
          %s191 = ssub.s32 256, 256
          %192 = vsyncadd %s186, %s191
          %s193 = smul.addr %s16, 2
          %s194 = smul.addr %s193, 128
          %s195 = scalar_lea.hbm %s1, %s194
          %s196 = sshll.u32 %s189, 4
          %s197 = int_to_ptr.vmem [resolvable:$true] %s196
          %202 = dma.hbm_to_vmem [thread:$0]  %s195, 256, %s197, %s186, 128, 128, 8
        $region32: #{tpu_custom_call.1} parent=23 // pred_fallthru
          _
      $region24: #{tpu_custom_call.1} parent=5 // pred_fallthru
        _
      %p203 = scmp.le.s32.totalorder 1, %s16
      %p204 = scmp.lt.s32.totalorder %s16, 7
      %p205 = pnand %p203, %p204
      %p206 = pneg %p205
      // Predicated region
      $region33: #{tpu_custom_call.1} parent=5 // pred_check
        _
      $region34: #{tpu_custom_call.1} parent=5 // pred_check_branch
        %208 = sbr.rel (%p205) target = $region36
      $region35: #{tpu_custom_call.1} parent=5 // pred_region
        %s209 = ssub.s32 %s16, 1
        %s210 = sand.u32 %s29, 1
        %s211 = scalar_lea.sflag [#allocation3], %s210
        %s212 = sand.u32 %s29, 1
        %s213 = smul.addr %s212, 16
        %s214 = scalar_lea.vmem [#allocation2], %s213
        // Predicated region
        $region37: #{tpu_custom_call.1} parent=35 // pred_check
          %p215 = pneg %p42
        $region38: #{tpu_custom_call.1} parent=35 // pred_check_branch
          %217 = sbr.rel (%p215) target = $region40
        $region39: #{tpu_custom_call.1} parent=35 // pred_region
          %218 = dma.done %s211, 256
        $region40: #{tpu_custom_call.1} parent=35 // pred_fallthru
          _
        %s219 = sand.u32 %s55, 1
        %s220 = scalar_lea.sflag [#allocation5], %s219
        %s221 = sand.u32 %s55, 1
        %s222 = smul.addr %s221, 16
        %s223 = scalar_lea.vmem [#allocation4], %s222
        // Predicated region
        $region41: #{tpu_custom_call.1} parent=35 // pred_check
          %p224 = pneg %p68
        $region42: #{tpu_custom_call.1} parent=35 // pred_check_branch
          %226 = sbr.rel (%p224) target = $region44
        $region43: #{tpu_custom_call.1} parent=35 // pred_region
          %227 = dma.done %s220, 256
        $region44: #{tpu_custom_call.1} parent=35 // pred_fallthru
          _
        %s228 = sand.u32 %s29, 1
        %s229 = scalar_lea.sflag [#allocation3], %s228
        %s230 = sand.u32 %s29, 1
        %s231 = smul.addr %s230, 16
        %s232 = scalar_lea.vmem [#allocation2], %s231
        %p233 = pneg %p42
        %p234 = pneg %p39
        %s235 = sand.u32 %s55, 1
        %s236 = scalar_lea.sflag [#allocation5], %s235
        %s237 = sand.u32 %s55, 1
        %s238 = smul.addr %s237, 16
        %s239 = scalar_lea.vmem [#allocation4], %s238
        %p240 = pneg %p68
        %p241 = pneg %p65
        %p242 = pneg %p89
        %p243 = pneg %p86
        %p244 = pneg %p110
        %p245 = pneg %p107
        %p246 = pneg %p136
        %p247 = pneg %p133
        %p248 = scmp.lt.s32.totalorder %s21, 5
        %s249 = scalar_select %p248, %s21, 5
        %s250 = scalar_lea.vmem %s4, %s249
        %p251 = scmp.lt.s32.totalorder %s21, 5
        %s252 = scalar_select %p251, %s21, 5
        %s253 = scalar_lea.vmem %s4, %s252
        %v254 = vld [vmem:[%s214] sm:$0xff]
        %v255 = vld [vmem:[%s214 + $0x8] sm:$0xff]
        %v256 = vld [vmem:[%s223] sm:$0xff]
        %v257 = vld [vmem:[%s223 + $0x8] sm:$0xff]
        %v258 = vld [vmem:[%s2] sm:$0x3f]
        %v259 = vld [vmem:[%s3] sm:$0xff]
        %v260 = vld [vmem:[%s3 + $0x8] sm:$0xff]
        %v261 = vmul.f32 %v254, %v254
        %v262 = vmul.f32 %v255, %v255
        %v263 = vmul.f32 %v256, %v256
        %v264 = vmul.f32 %v257, %v257
        %v265 = vmul.f32 %v254, %v256
        %v266 = vmul.f32 %v255, %v257
        %vm267 = vcmask 130048
        %v269 = vsel %vm267, %v254, 0
        %v272 = vsel %vm267, %v255, 0
        %v275 = vsel %vm267, %v256, 0
        %v278 = vsel %vm267, %v257, 0
        %v281 = vsel %vm267, %v261, 0
        %v284 = vsel %vm267, %v262, 0
        %v287 = vsel %vm267, %v263, 0
        %v290 = vsel %vm267, %v264, 0
        %v293 = vsel %vm267, %v265, 0
        %v296 = vsel %vm267, %v266, 0
        %298 = vmatprep.subr.mxu0 0.0
        %299 = vmatpush1.msra.mxu0 %v259
        %300 = vmatprep.subr.mxu0 0.0
        %301 = vmatpush1.msra.mxu0 %v260
        %302 = vmatprep.subr.mxu0 0.0
        %303 = vmatpush1.msra.mxu0 0.0
        %304 = vmatprep.subr.mxu0 0.0
        %305 = vmatpush1.msra.mxu0 0.0
        %306 = vmatprep.subr.mxu0 0.0
        %307 = vmatpush1.msra.mxu0 0.0
        %308 = vmatprep.subr.mxu0 0.0
        %309 = vmatpush1.msra.mxu0 0.0
        %310 = vmatprep.subr.mxu0 0.0
        %311 = vmatpush1.msra.mxu0 0.0
        %312 = vmatprep.subr.mxu0 0.0
        %313 = vmatpush1.msra.mxu0 0.0
        %314 = vmatprep.subr.mxu0 0.0
        %315 = vmatpush1.msra.mxu0 0.0
        %316 = vmatprep.subr.mxu0 0.0
        %317 = vmatpush1.msra.mxu0 0.0
        %318 = vmatprep.subr.mxu0 0.0
        %319 = vmatpush1.msra.mxu0 0.0
        %320 = vmatprep.subr.mxu0 0.0
        %321 = vmatpush1.msra.mxu0 0.0
        %322 = vmatprep.subr.mxu0 0.0
        %323 = vmatpush1.msra.mxu0 0.0
        %324 = vmatprep.subr.mxu0 0.0
        %325 = vmatpush1.msra.mxu0 0.0
        %326 = vmatprep.subr.mxu0 0.0
        %327 = vmatpush1.msra.mxu0 0.0
        %328 = vmatprep.subr.mxu0 0.0
        %329 = vmatpush1.msra.mxu0 0.0
        %330 = vmatprep.subr.mxu0 0.0
        %331 = vmatpush1.msra.mxu0 0.0
        %332 = vmatprep.subr.mxu0 0.0
        %333 = vmatpush1.msra.mxu0 0.0
        %334 = vmatprep.subr.mxu0 0.0
        %335 = vmatpush1.msra.mxu0 0.0
        %336 = vmatprep.subr.mxu0 0.0
        %337 = vmatpush1.msra.mxu0 0.0
        %338 = vmatprep.subr.mxu0 0.0
        %339 = vmatpush1.msra.mxu0 0.0
        %340 = vmatprep.subr.mxu0 0.0
        %341 = vmatpush1.msra.mxu0 0.0
        %342 = vmatprep.subr.mxu0 0.0
        %343 = vmatpush1.msra.mxu0 0.0
        %344 = vmatprep.subr.mxu0 0.0
        %345 = vmatpush1.msra.mxu0 0.0
        %346 = vmatprep.subr.mxu0 0.0
        %347 = vmatpush1.msra.mxu0 0.0
        %348 = vmatprep.subr.mxu0 0.0
        %349 = vmatpush1.msra.mxu0 0.0
        %350 = vmatprep.subr.mxu0 0.0
        %351 = vmatpush1.msra.mxu0 0.0
        %352 = vmatprep.subr.mxu0 0.0
        %353 = vmatpush1.msra.mxu0 0.0
        %354 = vmatprep.subr.mxu0 0.0
        %355 = vmatpush1.msra.mxu0 0.0
        %356 = vmatprep.subr.mxu0 0.0
        %357 = vmatpush1.msra.mxu0 0.0
        %358 = vmatprep.subr.mxu0 0.0
        %359 = vmatpush1.msra.mxu0 0.0
        %360 = vmatprep.subr.mxu0 0.0
        %361 = vmatpush1.msra.mxu0 0.0
        %362 = vmatprep.mubr.f32.mxu0 0.0
        %363 = vmatmul.mubr.f32.gmra.mrb[0].mxu0 %v269
        %v364 = vpop.f32.mrb[0].mxu0
        %v365 = vadd.f32 0.0, %v364
        %v366 = vpop.f32.mrb[0].mxu0
        %367 = vmatprep.mubr.f32.mxu0 0.0
        %368 = vmatmul.mubr.f32.gmra.mrb[0].mxu0 %v272
        %v369 = vpop.f32.mrb[0].mxu0
        %v370 = vadd.f32 0.0, %v369
        %v371 = vpop.f32.mrb[0].mxu0
        %372 = vmatprep.mubr.f32.mxu0 0.0
        %373 = vmatmul.mubr.f32.gmra.mrb[0].mxu0 %v275
        %v374 = vpop.f32.mrb[0].mxu0
        %v375 = vadd.f32 0.0, %v374
        %v376 = vpop.f32.mrb[0].mxu0
        %377 = vmatprep.mubr.f32.mxu0 0.0
        %378 = vmatmul.mubr.f32.gmra.mrb[0].mxu0 %v278
        %v379 = vpop.f32.mrb[0].mxu0
        %v380 = vadd.f32 0.0, %v379
        %v381 = vpop.f32.mrb[0].mxu0
        %382 = vmatprep.mubr.f32.mxu0 0.0
        %383 = vmatmul.mubr.f32.gmra.mrb[0].mxu0 %v281
        %v384 = vpop.f32.mrb[0].mxu0
        %v385 = vadd.f32 0.0, %v384
        %v386 = vpop.f32.mrb[0].mxu0
        %387 = vmatprep.mubr.f32.mxu0 0.0
        %388 = vmatmul.mubr.f32.gmra.mrb[0].mxu0 %v284
        %v389 = vpop.f32.mrb[0].mxu0
        %v390 = vadd.f32 0.0, %v389
        %v391 = vpop.f32.mrb[0].mxu0
        %392 = vmatprep.mubr.f32.mxu0 0.0
        %393 = vmatmul.mubr.f32.gmra.mrb[0].mxu0 %v287
        %v394 = vpop.f32.mrb[0].mxu0
        %v395 = vadd.f32 0.0, %v394
        %v396 = vpop.f32.mrb[0].mxu0
        %397 = vmatprep.mubr.f32.mxu0 0.0
        %398 = vmatmul.mubr.f32.gmra.mrb[0].mxu0 %v290
        %v399 = vpop.f32.mrb[0].mxu0
        %v400 = vadd.f32 0.0, %v399
        %v401 = vpop.f32.mrb[0].mxu0
        %402 = vmatprep.mubr.f32.mxu0 0.0
        %403 = vmatmul.mubr.f32.gmra.mrb[0].mxu0 %v293
        %v404 = vpop.f32.mrb[0].mxu0
        %v405 = vadd.f32 0.0, %v404
        %v406 = vpop.f32.mrb[0].mxu0
        %407 = vmatprep.mubr.f32.mxu0 0.0
        %408 = vmatmul.mubr.f32.gmra.mrb[0].mxu0 %v296
        %v409 = vpop.f32.mrb[0].mxu0
        %v410 = vadd.f32 0.0, %v409
        %v411 = vpop.f32.mrb[0].mxu0
        %412 = vdwg.mxu0
        %v414 = vsel %vm267, %v258, 0
        %416 = vmatprep.subr.mxu0 0.0
        %417 = vmatpush1.msra.mxu0 %v365
        %418 = vmatprep.subr.mxu0 0.0
        %419 = vmatpush1.msra.mxu0 %v370
        %420 = vmatprep.subr.mxu0 0.0
        %421 = vmatpush1.msra.mxu0 0.0
        %422 = vmatprep.subr.mxu0 0.0
        %423 = vmatpush1.msra.mxu0 0.0
        %424 = vmatprep.subr.mxu0 0.0
        %425 = vmatpush1.msra.mxu0 0.0
        %426 = vmatprep.subr.mxu0 0.0
        %427 = vmatpush1.msra.mxu0 0.0
        %428 = vmatprep.subr.mxu0 0.0
        %429 = vmatpush1.msra.mxu0 0.0
        %430 = vmatprep.subr.mxu0 0.0
        %431 = vmatpush1.msra.mxu0 0.0
        %432 = vmatprep.subr.mxu0 0.0
        %433 = vmatpush1.msra.mxu0 0.0
        %434 = vmatprep.subr.mxu0 0.0
        %435 = vmatpush1.msra.mxu0 0.0
        %436 = vmatprep.subr.mxu0 0.0
        %437 = vmatpush1.msra.mxu0 0.0
        %438 = vmatprep.subr.mxu0 0.0
        %439 = vmatpush1.msra.mxu0 0.0
        %440 = vmatprep.subr.mxu0 0.0
        %441 = vmatpush1.msra.mxu0 0.0
        %442 = vmatprep.subr.mxu0 0.0
        %443 = vmatpush1.msra.mxu0 0.0
        %444 = vmatprep.subr.mxu0 0.0
        %445 = vmatpush1.msra.mxu0 0.0
        %446 = vmatprep.subr.mxu0 0.0
        %447 = vmatpush1.msra.mxu0 0.0
        %448 = vmatprep.subr.mxu0 0.0
        %449 = vmatpush1.msra.mxu0 0.0
        %450 = vmatprep.subr.mxu0 0.0
        %451 = vmatpush1.msra.mxu0 0.0
        %452 = vmatprep.subr.mxu0 0.0
        %453 = vmatpush1.msra.mxu0 0.0
        %454 = vmatprep.subr.mxu0 0.0
        %455 = vmatpush1.msra.mxu0 0.0
        %456 = vmatprep.subr.mxu0 0.0
        %457 = vmatpush1.msra.mxu0 0.0
        %458 = vmatprep.subr.mxu0 0.0
        %459 = vmatpush1.msra.mxu0 0.0
        %460 = vmatprep.subr.mxu0 0.0
        %461 = vmatpush1.msra.mxu0 0.0
        %462 = vmatprep.subr.mxu0 0.0
        %463 = vmatpush1.msra.mxu0 0.0
        %464 = vmatprep.subr.mxu0 0.0
        %465 = vmatpush1.msra.mxu0 0.0
        %466 = vmatprep.subr.mxu0 0.0
        %467 = vmatpush1.msra.mxu0 0.0
        %468 = vmatprep.subr.mxu0 0.0
        %469 = vmatpush1.msra.mxu0 0.0
        %470 = vmatprep.subr.mxu0 0.0
        %471 = vmatpush1.msra.mxu0 0.0
        %472 = vmatprep.subr.mxu0 0.0
        %473 = vmatpush1.msra.mxu0 0.0
        %474 = vmatprep.subr.mxu0 0.0
        %475 = vmatpush1.msra.mxu0 0.0
        %476 = vmatprep.subr.mxu0 0.0
        %477 = vmatpush1.msra.mxu0 0.0
        %478 = vmatprep.subr.mxu0 0.0
        %479 = vmatpush1.msra.mxu0 0.0
        %480 = vmatprep.mubr.f32.mxu0 0.0
        %481 = vmatmul.mubr.f32.gmra.mrb[0].mxu0 %v414
        %v482 = vpop.f32.mrb[0].mxu0
        %v483 = vadd.f32 0.0, %v482
        %v484 = vpop.f32.mrb[0].mxu0
        %485 = vdwg.mxu0
        %486 = vmatprep.subr.mxu0 0.0
        %487 = vmatpush1.msra.mxu0 %v375
        %488 = vmatprep.subr.mxu0 0.0
        %489 = vmatpush1.msra.mxu0 %v380
        %490 = vmatprep.subr.mxu0 0.0
        %491 = vmatpush1.msra.mxu0 0.0
        %492 = vmatprep.subr.mxu0 0.0
        %493 = vmatpush1.msra.mxu0 0.0
        %494 = vmatprep.subr.mxu0 0.0
        %495 = vmatpush1.msra.mxu0 0.0
        %496 = vmatprep.subr.mxu0 0.0
        %497 = vmatpush1.msra.mxu0 0.0
        %498 = vmatprep.subr.mxu0 0.0
        %499 = vmatpush1.msra.mxu0 0.0
        %500 = vmatprep.subr.mxu0 0.0
        %501 = vmatpush1.msra.mxu0 0.0
        %502 = vmatprep.subr.mxu0 0.0
        %503 = vmatpush1.msra.mxu0 0.0
        %504 = vmatprep.subr.mxu0 0.0
        %505 = vmatpush1.msra.mxu0 0.0
        %506 = vmatprep.subr.mxu0 0.0
        %507 = vmatpush1.msra.mxu0 0.0
        %508 = vmatprep.subr.mxu0 0.0
        %509 = vmatpush1.msra.mxu0 0.0
        %510 = vmatprep.subr.mxu0 0.0
        %511 = vmatpush1.msra.mxu0 0.0
        %512 = vmatprep.subr.mxu0 0.0
        %513 = vmatpush1.msra.mxu0 0.0
        %514 = vmatprep.subr.mxu0 0.0
        %515 = vmatpush1.msra.mxu0 0.0
        %516 = vmatprep.subr.mxu0 0.0
        %517 = vmatpush1.msra.mxu0 0.0
        %518 = vmatprep.subr.mxu0 0.0
        %519 = vmatpush1.msra.mxu0 0.0
        %520 = vmatprep.subr.mxu0 0.0
        %521 = vmatpush1.msra.mxu0 0.0
        %522 = vmatprep.subr.mxu0 0.0
        %523 = vmatpush1.msra.mxu0 0.0
        %524 = vmatprep.subr.mxu0 0.0
        %525 = vmatpush1.msra.mxu0 0.0
        %526 = vmatprep.subr.mxu0 0.0
        %527 = vmatpush1.msra.mxu0 0.0
        %528 = vmatprep.subr.mxu0 0.0
        %529 = vmatpush1.msra.mxu0 0.0
        %530 = vmatprep.subr.mxu0 0.0
        %531 = vmatpush1.msra.mxu0 0.0
        %532 = vmatprep.subr.mxu0 0.0
        %533 = vmatpush1.msra.mxu0 0.0
        %534 = vmatprep.subr.mxu0 0.0
        %535 = vmatpush1.msra.mxu0 0.0
        %536 = vmatprep.subr.mxu0 0.0
        %537 = vmatpush1.msra.mxu0 0.0
        %538 = vmatprep.subr.mxu0 0.0
        %539 = vmatpush1.msra.mxu0 0.0
        %540 = vmatprep.subr.mxu0 0.0
        %541 = vmatpush1.msra.mxu0 0.0
        %542 = vmatprep.subr.mxu0 0.0
        %543 = vmatpush1.msra.mxu0 0.0
        %544 = vmatprep.subr.mxu0 0.0
        %545 = vmatpush1.msra.mxu0 0.0
        %546 = vmatprep.subr.mxu0 0.0
        %547 = vmatpush1.msra.mxu0 0.0
        %548 = vmatprep.subr.mxu0 0.0
        %549 = vmatpush1.msra.mxu0 0.0
        %550 = vmatprep.mubr.f32.mxu0 0.0
        %551 = vmatmul.mubr.f32.gmra.mrb[0].mxu0 %v414
        %v552 = vpop.f32.mrb[0].mxu0
        %v553 = vadd.f32 0.0, %v552
        %v554 = vpop.f32.mrb[0].mxu0
        %555 = vdwg.mxu0
        %556 = vmatprep.subr.mxu0 0.0
        %557 = vmatpush1.msra.mxu0 %v385
        %558 = vmatprep.subr.mxu0 0.0
        %559 = vmatpush1.msra.mxu0 %v390
        %560 = vmatprep.subr.mxu0 0.0
        %561 = vmatpush1.msra.mxu0 0.0
        %562 = vmatprep.subr.mxu0 0.0
        %563 = vmatpush1.msra.mxu0 0.0
        %564 = vmatprep.subr.mxu0 0.0
        %565 = vmatpush1.msra.mxu0 0.0
        %566 = vmatprep.subr.mxu0 0.0
        %567 = vmatpush1.msra.mxu0 0.0
        %568 = vmatprep.subr.mxu0 0.0
        %569 = vmatpush1.msra.mxu0 0.0
        %570 = vmatprep.subr.mxu0 0.0
        %571 = vmatpush1.msra.mxu0 0.0
        %572 = vmatprep.subr.mxu0 0.0
        %573 = vmatpush1.msra.mxu0 0.0
        %574 = vmatprep.subr.mxu0 0.0
        %575 = vmatpush1.msra.mxu0 0.0
        %576 = vmatprep.subr.mxu0 0.0
        %577 = vmatpush1.msra.mxu0 0.0
        %578 = vmatprep.subr.mxu0 0.0
        %579 = vmatpush1.msra.mxu0 0.0
        %580 = vmatprep.subr.mxu0 0.0
        %581 = vmatpush1.msra.mxu0 0.0
        %582 = vmatprep.subr.mxu0 0.0
        %583 = vmatpush1.msra.mxu0 0.0
        %584 = vmatprep.subr.mxu0 0.0
        %585 = vmatpush1.msra.mxu0 0.0
        %586 = vmatprep.subr.mxu0 0.0
        %587 = vmatpush1.msra.mxu0 0.0
        %588 = vmatprep.subr.mxu0 0.0
        %589 = vmatpush1.msra.mxu0 0.0
        %590 = vmatprep.subr.mxu0 0.0
        %591 = vmatpush1.msra.mxu0 0.0
        %592 = vmatprep.subr.mxu0 0.0
        %593 = vmatpush1.msra.mxu0 0.0
        %594 = vmatprep.subr.mxu0 0.0
        %595 = vmatpush1.msra.mxu0 0.0
        %596 = vmatprep.subr.mxu0 0.0
        %597 = vmatpush1.msra.mxu0 0.0
        %598 = vmatprep.subr.mxu0 0.0
        %599 = vmatpush1.msra.mxu0 0.0
        %600 = vmatprep.subr.mxu0 0.0
        %601 = vmatpush1.msra.mxu0 0.0
        %602 = vmatprep.subr.mxu0 0.0
        %603 = vmatpush1.msra.mxu0 0.0
        %604 = vmatprep.subr.mxu0 0.0
        %605 = vmatpush1.msra.mxu0 0.0
        %606 = vmatprep.subr.mxu0 0.0
        %607 = vmatpush1.msra.mxu0 0.0
        %608 = vmatprep.subr.mxu0 0.0
        %609 = vmatpush1.msra.mxu0 0.0
        %610 = vmatprep.subr.mxu0 0.0
        %611 = vmatpush1.msra.mxu0 0.0
        %612 = vmatprep.subr.mxu0 0.0
        %613 = vmatpush1.msra.mxu0 0.0
        %614 = vmatprep.subr.mxu0 0.0
        %615 = vmatpush1.msra.mxu0 0.0
        %616 = vmatprep.subr.mxu0 0.0
        %617 = vmatpush1.msra.mxu0 0.0
        %618 = vmatprep.subr.mxu0 0.0
        %619 = vmatpush1.msra.mxu0 0.0
        %620 = vmatprep.mubr.f32.mxu0 0.0
        %621 = vmatmul.mubr.f32.gmra.mrb[0].mxu0 %v414
        %v622 = vpop.f32.mrb[0].mxu0
        %v623 = vadd.f32 0.0, %v622
        %v624 = vpop.f32.mrb[0].mxu0
        %625 = vdwg.mxu0
        %626 = vmatprep.subr.mxu0 0.0
        %627 = vmatpush1.msra.mxu0 %v395
        %628 = vmatprep.subr.mxu0 0.0
        %629 = vmatpush1.msra.mxu0 %v400
        %630 = vmatprep.subr.mxu0 0.0
        %631 = vmatpush1.msra.mxu0 0.0
        %632 = vmatprep.subr.mxu0 0.0
        %633 = vmatpush1.msra.mxu0 0.0
        %634 = vmatprep.subr.mxu0 0.0
        %635 = vmatpush1.msra.mxu0 0.0
        %636 = vmatprep.subr.mxu0 0.0
        %637 = vmatpush1.msra.mxu0 0.0
        %638 = vmatprep.subr.mxu0 0.0
        %639 = vmatpush1.msra.mxu0 0.0
        %640 = vmatprep.subr.mxu0 0.0
        %641 = vmatpush1.msra.mxu0 0.0
        %642 = vmatprep.subr.mxu0 0.0
        %643 = vmatpush1.msra.mxu0 0.0
        %644 = vmatprep.subr.mxu0 0.0
        %645 = vmatpush1.msra.mxu0 0.0
        %646 = vmatprep.subr.mxu0 0.0
        %647 = vmatpush1.msra.mxu0 0.0
        %648 = vmatprep.subr.mxu0 0.0
        %649 = vmatpush1.msra.mxu0 0.0
        %650 = vmatprep.subr.mxu0 0.0
        %651 = vmatpush1.msra.mxu0 0.0
        %652 = vmatprep.subr.mxu0 0.0
        %653 = vmatpush1.msra.mxu0 0.0
        %654 = vmatprep.subr.mxu0 0.0
        %655 = vmatpush1.msra.mxu0 0.0
        %656 = vmatprep.subr.mxu0 0.0
        %657 = vmatpush1.msra.mxu0 0.0
        %658 = vmatprep.subr.mxu0 0.0
        %659 = vmatpush1.msra.mxu0 0.0
        %660 = vmatprep.subr.mxu0 0.0
        %661 = vmatpush1.msra.mxu0 0.0
        %662 = vmatprep.subr.mxu0 0.0
        %663 = vmatpush1.msra.mxu0 0.0
        %664 = vmatprep.subr.mxu0 0.0
        %665 = vmatpush1.msra.mxu0 0.0
        %666 = vmatprep.subr.mxu0 0.0
        %667 = vmatpush1.msra.mxu0 0.0
        %668 = vmatprep.subr.mxu0 0.0
        %669 = vmatpush1.msra.mxu0 0.0
        %670 = vmatprep.subr.mxu0 0.0
        %671 = vmatpush1.msra.mxu0 0.0
        %672 = vmatprep.subr.mxu0 0.0
        %673 = vmatpush1.msra.mxu0 0.0
        %674 = vmatprep.subr.mxu0 0.0
        %675 = vmatpush1.msra.mxu0 0.0
        %676 = vmatprep.subr.mxu0 0.0
        %677 = vmatpush1.msra.mxu0 0.0
        %678 = vmatprep.subr.mxu0 0.0
        %679 = vmatpush1.msra.mxu0 0.0
        %680 = vmatprep.subr.mxu0 0.0
        %681 = vmatpush1.msra.mxu0 0.0
        %682 = vmatprep.subr.mxu0 0.0
        %683 = vmatpush1.msra.mxu0 0.0
        %684 = vmatprep.subr.mxu0 0.0
        %685 = vmatpush1.msra.mxu0 0.0
        %686 = vmatprep.subr.mxu0 0.0
        %687 = vmatpush1.msra.mxu0 0.0
        %688 = vmatprep.subr.mxu0 0.0
        %689 = vmatpush1.msra.mxu0 0.0
        %690 = vmatprep.mubr.f32.mxu0 0.0
        %691 = vmatmul.mubr.f32.gmra.mrb[0].mxu0 %v414
        %v692 = vpop.f32.mrb[0].mxu0
        %v693 = vadd.f32 0.0, %v692
        %v694 = vpop.f32.mrb[0].mxu0
        %695 = vdwg.mxu0
        %696 = vmatprep.subr.mxu0 0.0
        %697 = vmatpush1.msra.mxu0 %v405
        %698 = vmatprep.subr.mxu0 0.0
        %699 = vmatpush1.msra.mxu0 %v410
        %700 = vmatprep.subr.mxu0 0.0
        %701 = vmatpush1.msra.mxu0 0.0
        %702 = vmatprep.subr.mxu0 0.0
        %703 = vmatpush1.msra.mxu0 0.0
        %704 = vmatprep.subr.mxu0 0.0
        %705 = vmatpush1.msra.mxu0 0.0
        %706 = vmatprep.subr.mxu0 0.0
        %707 = vmatpush1.msra.mxu0 0.0
        %708 = vmatprep.subr.mxu0 0.0
        %709 = vmatpush1.msra.mxu0 0.0
        %710 = vmatprep.subr.mxu0 0.0
        %711 = vmatpush1.msra.mxu0 0.0
        %712 = vmatprep.subr.mxu0 0.0
        %713 = vmatpush1.msra.mxu0 0.0
        %714 = vmatprep.subr.mxu0 0.0
        %715 = vmatpush1.msra.mxu0 0.0
        %716 = vmatprep.subr.mxu0 0.0
        %717 = vmatpush1.msra.mxu0 0.0
        %718 = vmatprep.subr.mxu0 0.0
        %719 = vmatpush1.msra.mxu0 0.0
        %720 = vmatprep.subr.mxu0 0.0
        %721 = vmatpush1.msra.mxu0 0.0
        %722 = vmatprep.subr.mxu0 0.0
        %723 = vmatpush1.msra.mxu0 0.0
        %724 = vmatprep.subr.mxu0 0.0
        %725 = vmatpush1.msra.mxu0 0.0
        %726 = vmatprep.subr.mxu0 0.0
        %727 = vmatpush1.msra.mxu0 0.0
        %728 = vmatprep.subr.mxu0 0.0
        %729 = vmatpush1.msra.mxu0 0.0
        %730 = vmatprep.subr.mxu0 0.0
        %731 = vmatpush1.msra.mxu0 0.0
        %732 = vmatprep.subr.mxu0 0.0
        %733 = vmatpush1.msra.mxu0 0.0
        %734 = vmatprep.subr.mxu0 0.0
        %735 = vmatpush1.msra.mxu0 0.0
        %736 = vmatprep.subr.mxu0 0.0
        %737 = vmatpush1.msra.mxu0 0.0
        %738 = vmatprep.subr.mxu0 0.0
        %739 = vmatpush1.msra.mxu0 0.0
        %740 = vmatprep.subr.mxu0 0.0
        %741 = vmatpush1.msra.mxu0 0.0
        %742 = vmatprep.subr.mxu0 0.0
        %743 = vmatpush1.msra.mxu0 0.0
        %744 = vmatprep.subr.mxu0 0.0
        %745 = vmatpush1.msra.mxu0 0.0
        %746 = vmatprep.subr.mxu0 0.0
        %747 = vmatpush1.msra.mxu0 0.0
        %748 = vmatprep.subr.mxu0 0.0
        %749 = vmatpush1.msra.mxu0 0.0
        %750 = vmatprep.subr.mxu0 0.0
        %751 = vmatpush1.msra.mxu0 0.0
        %752 = vmatprep.subr.mxu0 0.0
        %753 = vmatpush1.msra.mxu0 0.0
        %754 = vmatprep.subr.mxu0 0.0
        %755 = vmatpush1.msra.mxu0 0.0
        %756 = vmatprep.subr.mxu0 0.0
        %757 = vmatpush1.msra.mxu0 0.0
        %758 = vmatprep.subr.mxu0 0.0
        %759 = vmatpush1.msra.mxu0 0.0
        %760 = vmatprep.mubr.f32.mxu0 0.0
        %761 = vmatmul.mubr.f32.gmra.mrb[0].mxu0 %v414
        %v762 = vpop.f32.mrb[0].mxu0
        %v763 = vadd.f32 0.0, %v762
        %v764 = vpop.f32.mrb[0].mxu0
        %765 = vdwg.mxu0
        %v766 = vmul.f32 %v483, %v483
        %v767 = vmul.f32 %v553, %v553
        %v768 = vmul.f32 %v483, %v553
        %v769 = vsub.f32 %v623, %v766
        %v770 = vsub.f32 %v693, %v767
        %v771 = vsub.f32 %v763, %v768
        %v772 = vmul.f32 %v768, 2.0
        %v773 = vadd.f32 %v772, 0.0001
        %v774 = vmul.f32 %v771, 2.0
        %v775 = vadd.f32 %v774, 0.0009
        %v776 = vmul.f32 %v773, %v775
        %v777 = vadd.f32 %v766, %v767
        %v778 = vadd.f32 %v777, 0.0001
        %v779 = vadd.f32 %v769, %v770
        %v780 = vadd.f32 %v779, 0.0009
        %v781 = vmul.f32 %v778, %v780
        %v782 = vrcp.pop %v781
        %v783 = vmul.f32 %v776, %v782
        %vm784 = vcmask 46080
        %v785 = vsel %vm784, %v783, 0.0
        %786 = vadd.xlane.f32.xlu0 %v785
        %v787 = vpop.xlane.xlu0 %786
        %v788 = vrot.slane %v787, 4
        %v789 = vadd.f32 %v787, %v788
        %v790 = vrot.slane %v789, 2
        %v791 = vadd.f32 %v789, %v790
        %v792 = vrot.slane %v791, 1
        %v793 = vadd.f32 %v791, %v792
        %s794 = vtos %v793
        %v795 = vstv %s794
        %vm796 = vcmask 0
        %797 = vst.msk [vmem:[%s253] sm:$0x1] %vm796, %v795
        %p798 = scmp.lt.s32.totalorder %s21, 5
        %s799 = scalar_select %p798, %s21, 5
        %s800 = scalar_lea.vmem %s4, %s799
        // Predicated region
        $region45: #{tpu_custom_call.1} parent=35 // pred_check
          %p801 = pneg %p133
        $region46: #{tpu_custom_call.1} parent=35 // pred_check_branch
          %803 = sbr.rel (%p801) target = $region48
        $region47: #{tpu_custom_call.1} parent=35 // pred_region
          _
        $region48: #{tpu_custom_call.1} parent=35 // pred_fallthru
          _
      $region36: #{tpu_custom_call.1} parent=5 // pred_fallthru
        _
      %p804 = scmp.le.s32.totalorder 2, %s16
      // Predicated region
      $region49: #{tpu_custom_call.1} parent=5 // pred_check
        %p805 = pneg %p804
      $region50: #{tpu_custom_call.1} parent=5 // pred_check_branch
        %807 = sbr.rel (%p805) target = $region52
      $region51: #{tpu_custom_call.1} parent=5 // pred_region
        %s808 = ssub.s32 %s16, 2
        // Predicated region
        $region53: #{tpu_custom_call.1} parent=51 // pred_check
          %p809 = pneg %p139
        $region54: #{tpu_custom_call.1} parent=51 // pred_check_branch
          %811 = sbr.rel (%p809) target = $region56
        $region55: #{tpu_custom_call.1} parent=51 // pred_region
          %p812 = scmp.lt.s32.totalorder %s22, 5
          %s813 = scalar_select %p812, %s22, 5
          %s814 = scalar_lea.vmem %s4, %s813
        $region56: #{tpu_custom_call.1} parent=51 // pred_fallthru
          _
      $region52: #{tpu_custom_call.1} parent=5 // pred_fallthru
        _
    $region6: #{tpu_custom_call.1} parent=1 // loop_footer
      %s20 = sadd.s32 1, %s16
    $region7: #{tpu_custom_call.1} parent=1 // loop_footer_branch
      %15 = sbr.rel target = $region3
    $region8: #{tpu_custom_call.1} parent=1 // loop_exit
      _
    %815 = vsyncpa [#allocation3], 1
    %s816 = scalar_lea.sflag [#allocation3], 1
    %817 = vsyncpa %s816, 1
    %818 = vsyncpa [#allocation5], 1
    %s819 = scalar_lea.sflag [#allocation5], 1
    %820 = vsyncpa %s819, 1

</llo_original>
